<compile_context>
chip_gen: v6e
topology: v6e:2x2x1
jax: 0.10.0
libtpu: 0.0.40
codegen_flags: <defaults>
</compile_context>

<pallas_src>
import functools

import jax
import jax.numpy as jnp
from jax import lax
from jax.experimental import pallas as pl
from jax.experimental.pallas import tpu as pltpu
import numpy as np


LANE = 128


def _round_up(x, m):
    return ((x + m - 1) // m) * m


def critic_kernel(s_ref, a_ref, w1_ref, b1_ref, w2_ref, b2_ref, w3_ref,
                  b3_ref, out_ref, *, f1):
    # --- fc1 + ReLU : bf16 MXU pass, f32 accumulate, f32 elementwise ---
    h1 = jnp.dot(s_ref[...].astype(jnp.bfloat16), w1_ref[...],
                 preferred_element_type=jnp.float32)
    h1 = jnp.maximum(h1 + b1_ref[...], 0.0)                  # (tb, f1p) f32

    # --- fold cat((h1, action)) into h1's zero-padded tail columns ---
    # Columns [f1, f1p) of h1 are exactly zero (padded w1 cols and b1 are
    # zero, relu(0)=0), and w2's rows [f1, f1+A) hold the action weights, so
    # injecting `action` there makes one MXU pass compute the whole fc2.
    a = a_ref[...]                                            # (tb, A) f32
    col = lax.broadcasted_iota(jnp.int32, h1.shape, 1)
    for j in range(a.shape[1]):                               # action_size: static & tiny
        h1 = jnp.where(col == f1 + j, a[:, j:j + 1], h1)

    # --- fc2 + ReLU : single bf16 MXU pass over the padded K=f1p ---
    h2 = jnp.dot(h1.astype(jnp.bfloat16), w2_ref[...],
                 preferred_element_type=jnp.float32)
    h2 = jnp.maximum(h2 + b2_ref[...], 0.0)                   # (tb, f2p) f32

    # --- fc3 head (N=1): VPU multiply + two-stage reduce ---
    prod = h2 * w3_ref[...]                                   # (tb, f2p) f32
    f2p = prod.shape[1]
    ngroups = f2p // LANE
    if ngroups > 1 and ngroups * LANE == f2p:
        # Pre-add the 128-lane groups on the VPU, then one cross-lane reduce.
        partial = prod[:, 0:LANE]
        for g in range(1, ngroups):
            partial = partial + prod[:, g * LANE:(g + 1) * LANE]
    else:
        partial = prod
    q = jnp.sum(partial, axis=-1, keepdims=True) + b3_ref[0]
    out_ref[...] = q


def _choose_batch_tile(B, batch_tile):
    """Batch tile: big enough to amortize grid-step overhead, but >=2 steps
    for large batches so both v7x TensorCores get work."""
    if B <= min(batch_tile, 256):
        return B                                   # single step, tb == full dim
    half = _round_up((B + 1) // 2, 8)              # guarantees >= 2 grid steps
    return min(batch_tile, half, _round_up(B, 8))


def critic_forward(state, action, params, *, fc1_units=400, batch_tile=512):
    """Q(state, action) for all rows."""
    w1, b1, w2, b2, w3row, b3 = params
    B, state_size = state.shape
    action_size = action.shape[1]
    f1p = w1.shape[1]
    f2p = w2.shape[1]

    tb = _choose_batch_tile(B, batch_tile)
    grid = (pl.cdiv(B, tb),)

    flops = 2 * B * (state_size * f1p + f1p * f2p + f2p)
    bytes_accessed = (2 * (w1.size + w2.size)                       # bf16 weights
                      + 4 * (b1.size + b2.size + w3row.size + b3.size)
                      + 4 * B * (state_size + action_size + 1))
    cost = pl.CostEstimate(flops=flops, transcendentals=0,
                           bytes_accessed=bytes_accessed)

    kernel = functools.partial(critic_kernel, f1=fc1_units)

    # TODO(synk): a lane-dense (1, B) output layout is a possible further
    # micro-opt if store-side stalls ever show up; not worth the transpose here.
    return pl.pallas_call(
        kernel,
        out_shape=jax.ShapeDtypeStruct((B, 1), jnp.float32),
        grid=grid,
        in_specs=[
            pl.BlockSpec((tb, state_size), lambda i: (i, 0)),      # state tile
            pl.BlockSpec((tb, action_size), lambda i: (i, 0)),     # action tile
            pl.BlockSpec((state_size, f1p), lambda i: (0, 0)),     # w1 (bf16, resident)
            pl.BlockSpec((1, f1p), lambda i: (0, 0)),              # b1 (f32)
            pl.BlockSpec((f1p, f2p), lambda i: (0, 0)),            # w2 incl. action rows (bf16)
            pl.BlockSpec((1, f2p), lambda i: (0, 0)),              # b2 (f32)
            pl.BlockSpec((1, f2p), lambda i: (0, 0)),              # w3 as a row (f32)
            pl.BlockSpec(memory_space=pltpu.MemorySpace.SMEM),     # b3 scalar
        ],
        out_specs=pl.BlockSpec((tb, 1), lambda i: (i, 0)),
        compiler_params=pltpu.CompilerParams(
            dimension_semantics=("parallel",),
            vmem_limit_bytes=32 * 1024 * 1024),
        cost_estimate=cost,
    )(state, action, w1, b1, w2, b2, w3row, b3)


def init_params(key, state_size, action_size, fc_units=(400, 300)):
    """Init mirroring Critic.reset_parameters.

    Weights are stored (in, out), zero-padded so hidden widths are lane
    multiples (math unchanged), the action rows of fc2 are folded into the
    padded rows [f1, f1+A) of w2, and the two MXU weights are cast to bf16.
    """
    f1, f2 = fc_units
    f1p = _round_up(f1, LANE)
    f2p = _round_up(f2, LANE)
    assert f1 + action_size <= f1p, "action columns must fit in fc1 lane padding"
    k = jax.random.split(key, 7)

    lim1 = 1.0 / np.sqrt(f1)      # hidden_init uses weight.size()[0] == out_features
    lim2 = 1.0 / np.sqrt(f2)
    lim3 = 0.003

    w1 = jax.random.uniform(k[0], (state_size, f1), jnp.float32, -lim1, lim1)
    b1 = jax.random.uniform(k[1], (1, f1), jnp.float32,
                            -1.0 / np.sqrt(state_size), 1.0 / np.sqrt(state_size))
    w2x = jax.random.uniform(k[2], (f1, f2), jnp.float32, -lim2, lim2)
    w2a = jax.random.uniform(k[3], (action_size, f2), jnp.float32, -lim2, lim2)
    blim2 = 1.0 / np.sqrt(f1 + action_size)
    b2 = jax.random.uniform(k[4], (1, f2), jnp.float32, -blim2, blim2)
    w3 = jax.random.uniform(k[5], (f2, 1), jnp.float32, -lim3, lim3)
    blim3 = 1.0 / np.sqrt(f2)
    b3 = jax.random.uniform(k[6], (1,), jnp.float32, -blim3, blim3)

    def pad_cols(x, n):
        return jnp.pad(x, ((0, 0), (0, n - x.shape[1])))

    w1p = pad_cols(w1, f1p).astype(jnp.bfloat16)                  # (S, f1p) bf16
    b1p = pad_cols(b1, f1p)                                       # (1, f1p) f32

    # fc2 weight with the action rows folded into the padding rows [f1, f1+A).
    w2full = jnp.zeros((f1p, f2p), jnp.float32)
    w2full = w2full.at[:f1, :f2].set(w2x)
    w2full = w2full.at[f1:f1 + action_size, :f2].set(w2a)
    w2p = w2full.astype(jnp.bfloat16)                             # (f1p, f2p) bf16

    b2p = pad_cols(b2, f2p)                                       # (1, f2p) f32
    w3row = pad_cols(w3.T, f2p)                                   # (1, f2p) f32
    return (w1p, b1p, w2p, b2p, w3row, b3)


def critic_reference(state, action, params, *, fc1_units=400):
    """Pure-JAX f32 reference with the exact math of the PyTorch Critic
    (the folded/padded layout is algebraically identical to cat((h1, a)))."""
    w1, b1, w2, b2, w3row, b3 = params
    h1 = jax.nn.relu(state @ w1.astype(jnp.float32) + b1)         # pad cols are 0
    a_sz = action.shape[1]
    x = h1.at[:, fc1_units:fc1_units + a_sz].set(action)          # == torch.cat
    h2 = jax.nn.relu(x @ w2.astype(jnp.float32) + b2)
    return (h2 * w3row).sum(axis=-1, keepdims=True) + b3[None, :]


if __name__ == "__main__":
    state_size, action_size = 24, 2
    key = jax.random.PRNGKey(0)
    k_params, k_data = jax.random.split(key)
    params = init_params(k_params, state_size, action_size)

    cases = (
        (8, 512),     # tiny batch: single grid step
        (40, 16),     # forced small tiles: multi-step pipeline + partial last tile
        (300, 512),   # B > 256: tile capped so the parallel axis has >= 2 steps
    )
    for batch, tile in cases:
        ks, ka = jax.random.split(jax.random.fold_in(k_data, batch))
        state = jax.random.normal(ks, (batch, state_size), jnp.float32)
        action = jax.random.normal(ka, (batch, action_size), jnp.float32)

        out = critic_forward(state, action, params, batch_tile=tile)
        jax.block_until_ready(out)

        ref = critic_reference(state, action, params)
        # bf16 MXU operands with f32 accumulation: tolerances loosened vs f32.
        np.testing.assert_allclose(np.asarray(out), np.asarray(ref),
                                   rtol=2e-2, atol=2e-3)

    print("KERNEL_OK")
</pallas_src>

<mosaic_0001>
module attributes {stable_mosaic.version = 11 : i64} {
  func.func @critic_kernel(%arg0: i32, %arg1: memref<8x24xf32, #tpu.memory_space<vmem>>, %arg2: memref<8x2xf32, #tpu.memory_space<vmem>>, %arg3: memref<24x512xbf16, #tpu.memory_space<vmem>>, %arg4: memref<1x512xf32, #tpu.memory_space<vmem>>, %arg5: memref<512x384xbf16, #tpu.memory_space<vmem>>, %arg6: memref<1x384xf32, #tpu.memory_space<vmem>>, %arg7: memref<1x384xf32, #tpu.memory_space<vmem>>, %arg8: memref<1xf32, #tpu.memory_space<smem>>, %arg9: memref<8x1xf32, #tpu.memory_space<vmem>>) attributes {dimension_semantics = [#tpu.dimension_semantics<parallel>], iteration_bounds = array<i64: 1>, scalar_prefetch = 0 : i64, scratch_operands = 0 : i64, tpu.core_type = #tpu.core_type<tc>, window_params = [{transform_indices = @transform_0, window_bounds = array<i64: 8, 24>}, {transform_indices = @transform_1, window_bounds = array<i64: 8, 2>}, {pipeline_mode = #tpu.pipeline_mode<synchronous>, transform_indices = @transform_2, window_bounds = array<i64: 24, 512>}, {pipeline_mode = #tpu.pipeline_mode<synchronous>, transform_indices = @transform_3, window_bounds = array<i64: 1, 512>}, {pipeline_mode = #tpu.pipeline_mode<synchronous>, transform_indices = @transform_4, window_bounds = array<i64: 512, 384>}, {pipeline_mode = #tpu.pipeline_mode<synchronous>, transform_indices = @transform_5, window_bounds = array<i64: 1, 384>}, {pipeline_mode = #tpu.pipeline_mode<synchronous>, transform_indices = @transform_6, window_bounds = array<i64: 1, 384>}, {transform_indices = @transform_7, window_bounds = array<i64: 1>}, {transform_indices = @transform_8, window_bounds = array<i64: 8, 1>}]} {
    %c0 = arith.constant 0 : index
    %c0_0 = arith.constant 0 : index
    %0 = vector.load %arg1[%c0, %c0_0] : memref<8x24xf32, #tpu.memory_space<vmem>>, vector<8x24xf32>
    %1 = arith.truncf %0 : vector<8x24xf32> to vector<8x24xbf16>
    %c0_1 = arith.constant 0 : index
    %c0_2 = arith.constant 0 : index
    %2 = vector.load %arg3[%c0_1, %c0_2] : memref<24x512xbf16, #tpu.memory_space<vmem>>, vector<24x512xbf16>
    %cst = arith.constant dense<0.000000e+00> : vector<8x512xf32>
    %3 = tpu.matmul %1, %2, %cst {dimension_numbers = #tpu.dot_dimension_numbers<[1], [0], [0], [1], [0, 0, 1, 1], [], []>} : vector<8x24xbf16>, vector<24x512xbf16>, vector<8x512xf32> -> vector<8x512xf32>
    %c0_3 = arith.constant 0 : index
    %c0_4 = arith.constant 0 : index
    %4 = vector.load %arg4[%c0_3, %c0_4] : memref<1x512xf32, #tpu.memory_space<vmem>>, vector<1x512xf32>
    %5 = vector.broadcast %4 : vector<1x512xf32> to vector<8x512xf32>
    %6 = arith.addf %3, %5 : vector<8x512xf32>
    %cst_5 = arith.constant 0.000000e+00 : f32
    %7 = vector.broadcast %cst_5 : f32 to vector<8x512xf32>
    %8 = arith.maximumf %6, %7 : vector<8x512xf32>
    %c0_6 = arith.constant 0 : index
    %c0_7 = arith.constant 0 : index
    %9 = vector.load %arg2[%c0_6, %c0_7] : memref<8x2xf32, #tpu.memory_space<vmem>>, vector<8x2xf32>
    %10 = tpu.iota {dimensions = array<i32: 1>} : vector<8x512xi32>
    %c400_i32 = arith.constant 400 : i32
    %11 = vector.broadcast %c400_i32 : i32 to vector<8x512xi32>
    %12 = arith.cmpi eq, %10, %11 : vector<8x512xi32>
    %13 = vector.extract_strided_slice %9 {offsets = [0, 0], sizes = [8, 1], strides = [1, 1]} : vector<8x2xf32> to vector<8x1xf32>
    %14 = vector.shape_cast %13 : vector<8x1xf32> to vector<8x1xf32>
    %15 = vector.broadcast %14 : vector<8x1xf32> to vector<8x512xf32>
    %16 = arith.select %12, %15, %8 : vector<8x512xi1>, vector<8x512xf32>
    %c401_i32 = arith.constant 401 : i32
    %17 = vector.broadcast %c401_i32 : i32 to vector<8x512xi32>
    %18 = arith.cmpi eq, %10, %17 : vector<8x512xi32>
    %19 = vector.extract_strided_slice %9 {offsets = [0, 1], sizes = [8, 1], strides = [1, 1]} : vector<8x2xf32> to vector<8x1xf32>
    %20 = vector.shape_cast %19 : vector<8x1xf32> to vector<8x1xf32>
    %21 = vector.broadcast %20 : vector<8x1xf32> to vector<8x512xf32>
    %22 = arith.select %18, %21, %16 : vector<8x512xi1>, vector<8x512xf32>
    %23 = arith.truncf %22 : vector<8x512xf32> to vector<8x512xbf16>
    %c0_8 = arith.constant 0 : index
    %c0_9 = arith.constant 0 : index
    %24 = vector.load %arg5[%c0_8, %c0_9] : memref<512x384xbf16, #tpu.memory_space<vmem>>, vector<512x384xbf16>
    %cst_10 = arith.constant dense<0.000000e+00> : vector<8x384xf32>
    %25 = tpu.matmul %23, %24, %cst_10 {dimension_numbers = #tpu.dot_dimension_numbers<[1], [0], [0], [1], [0, 0, 1, 1], [], []>} : vector<8x512xbf16>, vector<512x384xbf16>, vector<8x384xf32> -> vector<8x384xf32>
    %c0_11 = arith.constant 0 : index
    %c0_12 = arith.constant 0 : index
    %26 = vector.load %arg6[%c0_11, %c0_12] : memref<1x384xf32, #tpu.memory_space<vmem>>, vector<1x384xf32>
    %27 = vector.broadcast %26 : vector<1x384xf32> to vector<8x384xf32>
    %28 = arith.addf %25, %27 : vector<8x384xf32>
    %cst_13 = arith.constant 0.000000e+00 : f32
    %29 = vector.broadcast %cst_13 : f32 to vector<8x384xf32>
    %30 = arith.maximumf %28, %29 : vector<8x384xf32>
    %c0_14 = arith.constant 0 : index
    %c0_15 = arith.constant 0 : index
    %31 = vector.load %arg7[%c0_14, %c0_15] : memref<1x384xf32, #tpu.memory_space<vmem>>, vector<1x384xf32>
    %32 = vector.broadcast %31 : vector<1x384xf32> to vector<8x384xf32>
    %33 = arith.mulf %30, %32 : vector<8x384xf32>
    %34 = vector.extract_strided_slice %33 {offsets = [0, 0], sizes = [8, 128], strides = [1, 1]} : vector<8x384xf32> to vector<8x128xf32>
    %35 = vector.extract_strided_slice %33 {offsets = [0, 128], sizes = [8, 128], strides = [1, 1]} : vector<8x384xf32> to vector<8x128xf32>
    %36 = arith.addf %34, %35 : vector<8x128xf32>
    %37 = vector.extract_strided_slice %33 {offsets = [0, 256], sizes = [8, 128], strides = [1, 1]} : vector<8x384xf32> to vector<8x128xf32>
    %38 = arith.addf %36, %37 : vector<8x128xf32>
    %cst_16 = arith.constant dense<0.000000e+00> : vector<8xf32>
    %39 = vector.multi_reduction <add>, %38, %cst_16 [1] : vector<8x128xf32> to vector<8xf32>
    %40 = vector.shape_cast %39 : vector<8xf32> to vector<8x1xf32>
    %c0_17 = arith.constant 0 : index
    %41 = memref.load %arg8[%c0_17] : memref<1xf32, #tpu.memory_space<smem>>
    %42 = vector.broadcast %41 : f32 to vector<8x1xf32>
    %43 = arith.addf %40, %42 : vector<8x1xf32>
    %c0_18 = arith.constant 0 : index
    %c0_19 = arith.constant 0 : index
    %44 = vector.load %arg9[%c0_18, %c0_19] : memref<8x1xf32, #tpu.memory_space<vmem>>, vector<8x1xf32>
    tpu.vector_store %arg9[%c0_18, %c0_19], %43 {strides = array<i32>} : memref<8x1xf32, #tpu.memory_space<vmem>>, vector<8x1xf32>,
    return
  }
  func.func @transform_0(%arg0: i32) -> (i32, i32) {
    %c0_i32 = arith.constant 0 : i32
    %c0_i32_0 = arith.constant 0 : i32
    return %arg0, %c0_i32 : i32, i32
  }
  func.func @transform_1(%arg0: i32) -> (i32, i32) {
    %c0_i32 = arith.constant 0 : i32
    %c0_i32_0 = arith.constant 0 : i32
    return %arg0, %c0_i32 : i32, i32
  }
  func.func @transform_2(%arg0: i32) -> (i32, i32) {
    %c0_i32 = arith.constant 0 : i32
    %c0_i32_0 = arith.constant 0 : i32
    %c0_i32_1 = arith.constant 0 : i32
    return %c0_i32, %c0_i32_0 : i32, i32
  }
  func.func @transform_3(%arg0: i32) -> (i32, i32) {
    %c0_i32 = arith.constant 0 : i32
    %c0_i32_0 = arith.constant 0 : i32
    %c0_i32_1 = arith.constant 0 : i32
    return %c0_i32, %c0_i32_0 : i32, i32
  }
  func.func @transform_4(%arg0: i32) -> (i32, i32) {
    %c0_i32 = arith.constant 0 : i32
    %c0_i32_0 = arith.constant 0 : i32
    %c0_i32_1 = arith.constant 0 : i32
    return %c0_i32, %c0_i32_0 : i32, i32
  }
  func.func @transform_5(%arg0: i32) -> (i32, i32) {
    %c0_i32 = arith.constant 0 : i32
    %c0_i32_0 = arith.constant 0 : i32
    %c0_i32_1 = arith.constant 0 : i32
    return %c0_i32, %c0_i32_0 : i32, i32
  }
  func.func @transform_6(%arg0: i32) -> (i32, i32) {
    %c0_i32 = arith.constant 0 : i32
    %c0_i32_0 = arith.constant 0 : i32
    %c0_i32_1 = arith.constant 0 : i32
    return %c0_i32, %c0_i32_0 : i32, i32
  }
  func.func @transform_7(%arg0: i32) -> i32 {
    %c0_i32 = arith.constant 0 : i32
    %c0_i32_0 = arith.constant 0 : i32
    return %c0_i32 : i32
  }
  func.func @transform_8(%arg0: i32) -> (i32, i32) {
    %c0_i32 = arith.constant 0 : i32
    %c0_i32_0 = arith.constant 0 : i32
    return %arg0, %c0_i32 : i32, i32
  }
}

</mosaic_0001>

<llo_original>
// kernel: tpu_custom_call.1
$region0: #{tpu_custom_call.1}
  #allocation0 [shape = 'u32[]', space=smem, size = 0x4, offset = 0x4, fixed_abs, tag = 'smem constant byte address 0x4 - core index']
  #allocation1 [shape = 'u32[144,128]{1,0:T(1,128)}', space=vmem, size = 0x12000, scoped, tag = 'internal scratch']
  #allocation2 [shape = 'f32[1]{0:T(128)S(6)}', space=smem, size = 0x200, scoped, tag = 'scoped memory for tpu_custom_call.1']
  %s0 = inlined_call_operand.vmem [shape: f32[8,24], index: 0, kind: input, shape index: {}]
  %s1 = inlined_call_operand.vmem [shape: f32[8,2], index: 1, kind: input, shape index: {}]
  %s2 = inlined_call_operand.hbm [shape: bf16[24,512], index: 2, kind: input, shape index: {}]
  %s3 = inlined_call_operand.vmem [shape: f32[1,512], index: 3, kind: input, shape index: {}]
  %s4 = inlined_call_operand.hbm [shape: bf16[512,384], index: 4, kind: input, shape index: {}]
  %s5 = inlined_call_operand.vmem [shape: f32[1,384], index: 5, kind: input, shape index: {}]
  %s6 = inlined_call_operand.vmem [shape: f32[1,384], index: 6, kind: input, shape index: {}]
  %s7 = inlined_call_operand.<no memory space> [shape: f32[1], index: 7, kind: input, shape index: {}]
  %s8 = inlined_call_operand.vmem [shape: f32[8,1], index: 8, kind: output, shape index: {}]
  %s9 = sld [smem:[#allocation0]]
  $region50: #{tpu_custom_call.1} parent=0
    _
  %s11 = ssub.s32 1, %s9
  %s12 = scalar_select 0, %s11, %s9
  %13 = sst [smem:[#allocation2]] %s7
  $region1: #{tpu_custom_call.1} parent=0
    #allocation3 [shape = 'u8[24576]{0}', space=vmem, size = 0x6000, scoped, tag = 'input window, operand 2, single buffered']
    #allocation4 [shape = 's32[1]{0}', space=sflag, size = 0x4, scoped, tag = 'scoped memory for tpu_custom_call.1']
    #allocation5 [shape = 'u8[393216]{0}', space=vmem, size = 0x60000, scoped, tag = 'input window, operand 4, single buffered']
    #allocation6 [shape = 's32[1]{0}', space=sflag, size = 0x4, scoped, tag = 'scoped memory for tpu_custom_call.1']
    %14 = vsyncpa [#allocation4], 0
    %15 = vsyncpa [#allocation6], 0
    // Predicated region
    $region2: #{tpu_custom_call.1} parent=1 // pred_check
      _
    $region3: #{tpu_custom_call.1} parent=1 // pred_check_branch
      %17 = sbr.rel (0) target = $region5
    $region4: #{tpu_custom_call.1} parent=1 // pred_region
      _
    $region5: #{tpu_custom_call.1} parent=1 // pred_fallthru
      _
    // Predicated region
    $region6: #{tpu_custom_call.1} parent=1 // pred_check
      _
    $region7: #{tpu_custom_call.1} parent=1 // pred_check_branch
      %19 = sbr.rel (0) target = $region9
    $region8: #{tpu_custom_call.1} parent=1 // pred_region
      _
    $region9: #{tpu_custom_call.1} parent=1 // pred_fallthru
      _
    // Predicated region
    $region10: #{tpu_custom_call.1} parent=1 // pred_check
      _
    $region11: #{tpu_custom_call.1} parent=1 // pred_check_branch
      %21 = sbr.rel (0) target = $region13
    $region12: #{tpu_custom_call.1} parent=1 // pred_region
      %s23 = ssub.s32 768, 768
      %24 = vsyncadd [#allocation4], %s23
      %s25 = sshll.u32 [#allocation3], 4
      %s26 = int_to_ptr.vmem [resolvable:$true] %s25
      %31 = dma.hbm_to_vmem [thread:$0]  %s2, 768, %s26, [#allocation4], 256, 256, 16
    $region13: #{tpu_custom_call.1} parent=1 // pred_fallthru
      _
    // Predicated region
    $region14: #{tpu_custom_call.1} parent=1 // pred_check
      _
    $region15: #{tpu_custom_call.1} parent=1 // pred_check_branch
      %33 = sbr.rel (0) target = $region17
    $region16: #{tpu_custom_call.1} parent=1 // pred_region
      _
    $region17: #{tpu_custom_call.1} parent=1 // pred_fallthru
      _
    // Predicated region
    $region18: #{tpu_custom_call.1} parent=1 // pred_check
      _
    $region19: #{tpu_custom_call.1} parent=1 // pred_check_branch
      %35 = sbr.rel (0) target = $region21
    $region20: #{tpu_custom_call.1} parent=1 // pred_region
      %s37 = ssub.s32 12288, 12288
      %38 = vsyncadd [#allocation6], %s37
      %s39 = sshll.u32 [#allocation5], 4
      %s40 = int_to_ptr.vmem [resolvable:$true] %s39
      %45 = dma.hbm_to_vmem [thread:$0]  %s4, 12288, %s40, [#allocation6], 192, 192, 12
    $region21: #{tpu_custom_call.1} parent=1 // pred_fallthru
      _
    // Predicated region
    $region22: #{tpu_custom_call.1} parent=1 // pred_check
      _
    $region23: #{tpu_custom_call.1} parent=1 // pred_check_branch
      %47 = sbr.rel (0) target = $region25
    $region24: #{tpu_custom_call.1} parent=1 // pred_region
      _
    $region25: #{tpu_custom_call.1} parent=1 // pred_fallthru
      _
    // Predicated region
    $region26: #{tpu_custom_call.1} parent=1 // pred_check
      _
    $region27: #{tpu_custom_call.1} parent=1 // pred_check_branch
      %49 = sbr.rel (0) target = $region29
    $region28: #{tpu_custom_call.1} parent=1 // pred_region
      _
    $region29: #{tpu_custom_call.1} parent=1 // pred_fallthru
      _
    // Predicated region
    $region30: #{tpu_custom_call.1} parent=1 // pred_check
      _
    $region31: #{tpu_custom_call.1} parent=1 // pred_check_branch
      %51 = sbr.rel (0) target = $region33
    $region32: #{tpu_custom_call.1} parent=1 // pred_region
      _
    $region33: #{tpu_custom_call.1} parent=1 // pred_fallthru
      _
    // Predicated region
    $region34: #{tpu_custom_call.1} parent=1 // pred_check
      _
    $region35: #{tpu_custom_call.1} parent=1 // pred_check_branch
      %53 = sbr.rel (0) target = $region37
    $region36: #{tpu_custom_call.1} parent=1 // pred_region
      %54 = dma.done [#allocation4], 768
    $region37: #{tpu_custom_call.1} parent=1 // pred_fallthru
      _
    // Predicated region
    $region38: #{tpu_custom_call.1} parent=1 // pred_check
      _
    $region39: #{tpu_custom_call.1} parent=1 // pred_check_branch
      %56 = sbr.rel (0) target = $region41
    $region40: #{tpu_custom_call.1} parent=1 // pred_region
      %57 = dma.done [#allocation6], 12288
    $region41: #{tpu_custom_call.1} parent=1 // pred_fallthru
      _
    %v59 = vld [vmem:[%s0] sm:$0xff]
    %v60 = vpack.c.bf16 %v59, %v59
    %v61 = vld [vmem:[#allocation3] sm:$0xff]
    %v62 = vld [vmem:[#allocation3 + $0x8] sm:$0xff]
    %v63 = vld [vmem:[#allocation3 + $0x10] sm:$0xff]
    %v64 = vld [vmem:[#allocation3 + $0x18] sm:$0xff]
    %v65 = vld [vmem:[#allocation3 + $0x20] sm:$0xff]
    %v66 = vld [vmem:[#allocation3 + $0x28] sm:$0xff]
    %v67 = vld [vmem:[%s3] sm:$0xf]
    %v69 = vlaneseq
    %v70 = vshrl.u32 %v69, 7
    %v71 = vsub.s32 0, %v70
    %v72 = vrot.slane %v67, %v71
    %v73 = vlaneseq
    %v74 = vshrl.u32 %v73, 7
    %v75 = vsub.s32 1, %v74
    %v76 = vrot.slane %v67, %v75
    %v77 = vlaneseq
    %v78 = vshrl.u32 %v77, 7
    %v79 = vsub.s32 2, %v78
    %v80 = vrot.slane %v67, %v79
    %v81 = vlaneseq
    %v82 = vshrl.u32 %v81, 7
    %v83 = vsub.s32 3, %v82
    %v84 = vrot.slane %v67, %v83
    %v95 = vunpack.c.l.b16 %v61
    %v96 = vunpack.c.h.b16 %v61
    %v97 = vunpack.c.l.b16 %v62
    %v98 = vunpack.c.h.b16 %v62
    %v99 = vunpack.c.l.b16 %v63
    %v100 = vunpack.c.h.b16 %v63
    %v101 = vunpack.c.l.b16 %v64
    %v102 = vunpack.c.h.b16 %v64
    %v103 = vunpack.c.l.b16 %v65
    %v104 = vunpack.c.h.b16 %v65
    %v105 = vunpack.c.l.b16 %v66
    %v106 = vunpack.c.h.b16 %v66
    %v107 = vpack.c.b16 %v99, %v95
    %v108 = vpack.c.b16 %v100, %v96
    %v109 = vpack.c.b16 %v101, %v97
    %v110 = vpack.c.b16 %v102, %v98
    %v111 = vpack.c.b16 %v103, %v103
    %v112 = vpack.c.b16 %v104, %v104
    %v113 = vpack.c.b16 %v105, %v105
    %v114 = vpack.c.b16 %v106, %v106
    %vm119 = vcmask 195584
    %v121 = vsel %vm119, %v60, 0
    %vm123 = vcmask 1043456
    %v125 = vsel %vm123, %v111, 0
    %v128 = vsel %vm123, %v112, 0
    %v131 = vsel %vm123, %v113, 0
    %v134 = vsel %vm123, %v114, 0
    %136 = vmatprep.subr.bf16.mxu0 0
    %137 = vmatpush1.bf16.msra.mxu0 0
    %138 = vmatprep.subr.bf16.mxu0 0
    %139 = vmatpush1.bf16.msra.mxu0 0
    %140 = vmatprep.subr.bf16.mxu0 0
    %141 = vmatpush1.bf16.msra.mxu0 0
    %142 = vmatprep.subr.bf16.mxu0 0
    %143 = vmatpush1.bf16.msra.mxu0 0
    %144 = vmatprep.subr.bf16.mxu0 0
    %145 = vmatpush1.bf16.msra.mxu0 0
    %146 = vmatprep.subr.bf16.mxu0 0
    %147 = vmatpush1.bf16.msra.mxu0 0
    %148 = vmatprep.subr.bf16.mxu0 %v128
    %149 = vmatpush1.bf16.msra.mxu0 %v125
    %150 = vmatprep.subr.bf16.mxu0 %v108
    %151 = vmatpush1.bf16.msra.mxu0 %v107
    %152 = vmatprep.subr.bf16.mxu0 0
    %153 = vmatpush2.bf16.msra.mxu0 0
    %154 = vmatprep.subr.bf16.mxu0 0
    %155 = vmatpush2.bf16.msra.mxu0 0
    %156 = vmatprep.subr.bf16.mxu0 0
    %157 = vmatpush2.bf16.msra.mxu0 0
    %158 = vmatprep.subr.bf16.mxu0 0
    %159 = vmatpush2.bf16.msra.mxu0 0
    %160 = vmatprep.subr.bf16.mxu0 0
    %161 = vmatpush2.bf16.msra.mxu0 0
    %162 = vmatprep.subr.bf16.mxu0 0
    %163 = vmatpush2.bf16.msra.mxu0 0
    %164 = vmatprep.subr.bf16.mxu0 0
    %165 = vmatpush2.bf16.msra.mxu0 0
    %166 = vmatprep.subr.bf16.mxu0 0
    %167 = vmatpush2.bf16.msra.mxu0 0
    %168 = vmatprep.mubr.bf16.mxu0 0
    %169 = vmatmul.mubr.bf16.gmra.mxu0 %v121
    %v170 = vpop.f32.mrf.mxu0
    %v171 = vadd.f32 %v72, %v170
    %v172 = vpop.f32.mrf.mxu0
    %v173 = vadd.f32 %v76, %v172
    %v174 = vpop.f32.mrf.mxu0
    %v175 = vpop.f32.mrf.mxu0
    %176 = vdwg.mxu0
    %177 = vmatprep.subr.bf16.mxu0 0
    %178 = vmatpush1.bf16.msra.mxu0 0
    %179 = vmatprep.subr.bf16.mxu0 0
    %180 = vmatpush1.bf16.msra.mxu0 0
    %181 = vmatprep.subr.bf16.mxu0 0
    %182 = vmatpush1.bf16.msra.mxu0 0
    %183 = vmatprep.subr.bf16.mxu0 0
    %184 = vmatpush1.bf16.msra.mxu0 0
    %185 = vmatprep.subr.bf16.mxu0 0
    %186 = vmatpush1.bf16.msra.mxu0 0
    %187 = vmatprep.subr.bf16.mxu0 0
    %188 = vmatpush1.bf16.msra.mxu0 0
    %189 = vmatprep.subr.bf16.mxu0 %v134
    %190 = vmatpush1.bf16.msra.mxu0 %v131
    %191 = vmatprep.subr.bf16.mxu0 %v110
    %192 = vmatpush1.bf16.msra.mxu0 %v109
    %193 = vmatprep.subr.bf16.mxu0 0
    %194 = vmatpush2.bf16.msra.mxu0 0
    %195 = vmatprep.subr.bf16.mxu0 0
    %196 = vmatpush2.bf16.msra.mxu0 0
    %197 = vmatprep.subr.bf16.mxu0 0
    %198 = vmatpush2.bf16.msra.mxu0 0
    %199 = vmatprep.subr.bf16.mxu0 0
    %200 = vmatpush2.bf16.msra.mxu0 0
    %201 = vmatprep.subr.bf16.mxu0 0
    %202 = vmatpush2.bf16.msra.mxu0 0
    %203 = vmatprep.subr.bf16.mxu0 0
    %204 = vmatpush2.bf16.msra.mxu0 0
    %205 = vmatprep.subr.bf16.mxu0 0
    %206 = vmatpush2.bf16.msra.mxu0 0
    %207 = vmatprep.subr.bf16.mxu0 0
    %208 = vmatpush2.bf16.msra.mxu0 0
    %209 = vmatprep.mubr.bf16.mxu0 0
    %210 = vmatmul.mubr.bf16.gmra.mxu0 %v121
    %v211 = vpop.f32.mrf.mxu0
    %v212 = vadd.f32 %v80, %v211
    %v213 = vpop.f32.mrf.mxu0
    %v214 = vadd.f32 %v84, %v213
    %v215 = vpop.f32.mrf.mxu0
    %v216 = vpop.f32.mrf.mxu0
    %217 = vdwg.mxu0
    %v218 = vmax.f32 %v171, 0.0
    %v219 = vmax.f32 %v173, 0.0
    %v220 = vmax.f32 %v212, 0.0
    %v221 = vmax.f32 %v214, 0.0
    %v222 = vld [vmem:[%s1] sm:$0xff]
    %v223 = vlaneseq
    %v224 = vand.u32 %v223, 127
    %v225 = vadd.s32 %v224, 128
    %v226 = vadd.s32 %v224, 256
    %v227 = vadd.s32 %v224, 384
    %vm228 = vcmp.eq.s32.totalorder %v224, 400
    %vm229 = vcmp.eq.s32.totalorder %v225, 400
    %vm230 = vcmp.eq.s32.totalorder %v226, 400
    %vm231 = vcmp.eq.s32.totalorder %v227, 400
    %233 = vset.pattern.permute.xlu0 0
    %234 = vperm.xlu0 %233, %v222
    %v235 = vpop.permute.xlu0 %234
    %v237 = vsel %vm228, %v235, %v218
    %v238 = vsel %vm229, %v235, %v219
    %v239 = vsel %vm230, %v235, %v220
    %v240 = vsel %vm231, %v235, %v221
    %vm241 = vcmp.eq.s32.totalorder %v224, 401
    %vm242 = vcmp.eq.s32.totalorder %v225, 401
    %vm243 = vcmp.eq.s32.totalorder %v226, 401
    %vm244 = vcmp.eq.s32.totalorder %v227, 401
    %245 = vset.pattern.permute.xlu0 1
    %246 = vperm.xlu0 %245, %v222
    %v247 = vpop.permute.xlu0 %246
    %v249 = vsel %vm241, %v247, %v237
    %v250 = vsel %vm242, %v247, %v238
    %v251 = vsel %vm243, %v247, %v239
    %v252 = vsel %vm244, %v247, %v240
    %v253 = vpack.c.bf16 %v249, %v249
    %v254 = vpack.c.bf16 %v250, %v250
    %v255 = vpack.c.bf16 %v251, %v251
    %v256 = vpack.c.bf16 %v252, %v252
    %v257 = vld [vmem:[#allocation5] sm:$0xff]
    %v258 = vld [vmem:[#allocation5 + $0x8] sm:$0xf]
    %v259 = vld [vmem:[#allocation5 + $0xc] sm:$0xff]
    %v260 = vld [vmem:[#allocation5 + $0x14] sm:$0xf]
    %v261 = vld [vmem:[#allocation5 + $0x18] sm:$0xff]
    %v262 = vld [vmem:[#allocation5 + $0x20] sm:$0xf]
    %v263 = vld [vmem:[#allocation5 + $0x24] sm:$0xff]
    %v264 = vld [vmem:[#allocation5 + $0x2c] sm:$0xf]
    %v265 = vld [vmem:[#allocation5 + $0x30] sm:$0xff]
    %v266 = vld [vmem:[#allocation5 + $0x38] sm:$0xf]
    %v267 = vld [vmem:[#allocation5 + $0x3c] sm:$0xff]
    %v268 = vld [vmem:[#allocation5 + $0x44] sm:$0xf]
    %v269 = vld [vmem:[#allocation5 + $0x48] sm:$0xff]
    %v270 = vld [vmem:[#allocation5 + $0x50] sm:$0xf]
    %v271 = vld [vmem:[#allocation5 + $0x54] sm:$0xff]
    %v272 = vld [vmem:[#allocation5 + $0x5c] sm:$0xf]
    %v273 = vld [vmem:[#allocation5 + $0x60] sm:$0xff]
    %v274 = vld [vmem:[#allocation5 + $0x68] sm:$0xf]
    %v275 = vld [vmem:[#allocation5 + $0x6c] sm:$0xff]
    %v276 = vld [vmem:[#allocation5 + $0x74] sm:$0xf]
    %v277 = vld [vmem:[#allocation5 + $0x78] sm:$0xff]
    %v278 = vld [vmem:[#allocation5 + $0x80] sm:$0xf]
    %v279 = vld [vmem:[#allocation5 + $0x84] sm:$0xff]
    %v280 = vld [vmem:[#allocation5 + $0x8c] sm:$0xf]
    %v281 = vld [vmem:[#allocation5 + $0x90] sm:$0xff]
    %v282 = vld [vmem:[#allocation5 + $0x98] sm:$0xf]
    %v283 = vld [vmem:[#allocation5 + $0x9c] sm:$0xff]
    %v284 = vld [vmem:[#allocation5 + $0xa4] sm:$0xf]
    %v285 = vld [vmem:[#allocation5 + $0xa8] sm:$0xff]
    %v286 = vld [vmem:[#allocation5 + $0xb0] sm:$0xf]
    %v287 = vld [vmem:[#allocation5 + $0xb4] sm:$0xff]
    %v288 = vld [vmem:[#allocation5 + $0xbc] sm:$0xf]
    %v289 = vld [vmem:[#allocation5 + $0xc0] sm:$0xff]
    %v290 = vld [vmem:[#allocation5 + $0xc8] sm:$0xf]
    %v291 = vld [vmem:[#allocation5 + $0xcc] sm:$0xff]
    %v292 = vld [vmem:[#allocation5 + $0xd4] sm:$0xf]
    %v293 = vld [vmem:[#allocation5 + $0xd8] sm:$0xff]
    %v294 = vld [vmem:[#allocation5 + $0xe0] sm:$0xf]
    %v295 = vld [vmem:[#allocation5 + $0xe4] sm:$0xff]
    %v296 = vld [vmem:[#allocation5 + $0xec] sm:$0xf]
    %v297 = vld [vmem:[#allocation5 + $0xf0] sm:$0xff]
    %v298 = vld [vmem:[#allocation5 + $0xf8] sm:$0xf]
    %v299 = vld [vmem:[#allocation5 + $0xfc] sm:$0xff]
    %v300 = vld [vmem:[#allocation5 + $0x104] sm:$0xf]
    %v301 = vld [vmem:[#allocation5 + $0x108] sm:$0xff]
    %v302 = vld [vmem:[#allocation5 + $0x110] sm:$0xf]
    %v303 = vld [vmem:[#allocation5 + $0x114] sm:$0xff]
    %v304 = vld [vmem:[#allocation5 + $0x11c] sm:$0xf]
    %v305 = vld [vmem:[#allocation5 + $0x120] sm:$0xff]
    %v306 = vld [vmem:[#allocation5 + $0x128] sm:$0xf]
    %v307 = vld [vmem:[#allocation5 + $0x12c] sm:$0xff]
    %v308 = vld [vmem:[#allocation5 + $0x134] sm:$0xf]
    %v309 = vld [vmem:[#allocation5 + $0x138] sm:$0xff]
    %v310 = vld [vmem:[#allocation5 + $0x140] sm:$0xf]
    %v311 = vld [vmem:[#allocation5 + $0x144] sm:$0xff]
    %v312 = vld [vmem:[#allocation5 + $0x14c] sm:$0xf]
    %v313 = vld [vmem:[#allocation5 + $0x150] sm:$0xff]
    %v314 = vld [vmem:[#allocation5 + $0x158] sm:$0xf]
    %v315 = vld [vmem:[#allocation5 + $0x15c] sm:$0xff]
    %v316 = vld [vmem:[#allocation5 + $0x164] sm:$0xf]
    %v317 = vld [vmem:[#allocation5 + $0x168] sm:$0xff]
    %v318 = vld [vmem:[#allocation5 + $0x170] sm:$0xf]
    %v319 = vld [vmem:[#allocation5 + $0x174] sm:$0xff]
    %v320 = vld [vmem:[#allocation5 + $0x17c] sm:$0xf]
    %v321 = vld [vmem:[#allocation5 + $0x180] sm:$0xff]
    %v322 = vld [vmem:[#allocation5 + $0x188] sm:$0xf]
    %v323 = vld [vmem:[#allocation5 + $0x18c] sm:$0xff]
    %v324 = vld [vmem:[#allocation5 + $0x194] sm:$0xf]
    %v325 = vld [vmem:[#allocation5 + $0x198] sm:$0xff]
    %v326 = vld [vmem:[#allocation5 + $0x1a0] sm:$0xf]
    %v327 = vld [vmem:[#allocation5 + $0x1a4] sm:$0xff]
    %v328 = vld [vmem:[#allocation5 + $0x1ac] sm:$0xf]
    %v329 = vld [vmem:[#allocation5 + $0x1b0] sm:$0xff]
    %v330 = vld [vmem:[#allocation5 + $0x1b8] sm:$0xf]
    %v331 = vld [vmem:[#allocation5 + $0x1bc] sm:$0xff]
    %v332 = vld [vmem:[#allocation5 + $0x1c4] sm:$0xf]
    %v333 = vld [vmem:[#allocation5 + $0x1c8] sm:$0xff]
    %v334 = vld [vmem:[#allocation5 + $0x1d0] sm:$0xf]
    %v335 = vld [vmem:[#allocation5 + $0x1d4] sm:$0xff]
    %v336 = vld [vmem:[#allocation5 + $0x1dc] sm:$0xf]
    %v337 = vld [vmem:[#allocation5 + $0x1e0] sm:$0xff]
    %v338 = vld [vmem:[#allocation5 + $0x1e8] sm:$0xf]
    %v339 = vld [vmem:[#allocation5 + $0x1ec] sm:$0xff]
    %v340 = vld [vmem:[#allocation5 + $0x1f4] sm:$0xf]
    %v341 = vld [vmem:[#allocation5 + $0x1f8] sm:$0xff]
    %v342 = vld [vmem:[#allocation5 + $0x200] sm:$0xf]
    %v343 = vld [vmem:[#allocation5 + $0x204] sm:$0xff]
    %v344 = vld [vmem:[#allocation5 + $0x20c] sm:$0xf]
    %v345 = vld [vmem:[#allocation5 + $0x210] sm:$0xff]
    %v346 = vld [vmem:[#allocation5 + $0x218] sm:$0xf]
    %v347 = vld [vmem:[#allocation5 + $0x21c] sm:$0xff]
    %v348 = vld [vmem:[#allocation5 + $0x224] sm:$0xf]
    %v349 = vld [vmem:[#allocation5 + $0x228] sm:$0xff]
    %v350 = vld [vmem:[#allocation5 + $0x230] sm:$0xf]
    %v351 = vld [vmem:[#allocation5 + $0x234] sm:$0xff]
    %v352 = vld [vmem:[#allocation5 + $0x23c] sm:$0xf]
    %v353 = vld [vmem:[#allocation5 + $0x240] sm:$0xff]
    %v354 = vld [vmem:[#allocation5 + $0x248] sm:$0xf]
    %v355 = vld [vmem:[#allocation5 + $0x24c] sm:$0xff]
    %v356 = vld [vmem:[#allocation5 + $0x254] sm:$0xf]
    %v357 = vld [vmem:[#allocation5 + $0x258] sm:$0xff]
    %v358 = vld [vmem:[#allocation5 + $0x260] sm:$0xf]
    %v359 = vld [vmem:[#allocation5 + $0x264] sm:$0xff]
    %v360 = vld [vmem:[#allocation5 + $0x26c] sm:$0xf]
    %v361 = vld [vmem:[#allocation5 + $0x270] sm:$0xff]
    %v362 = vld [vmem:[#allocation5 + $0x278] sm:$0xf]
    %v363 = vld [vmem:[#allocation5 + $0x27c] sm:$0xff]
    %v364 = vld [vmem:[#allocation5 + $0x284] sm:$0xf]
    %v365 = vld [vmem:[#allocation5 + $0x288] sm:$0xff]
    %v366 = vld [vmem:[#allocation5 + $0x290] sm:$0xf]
    %v367 = vld [vmem:[#allocation5 + $0x294] sm:$0xff]
    %v368 = vld [vmem:[#allocation5 + $0x29c] sm:$0xf]
    %v369 = vld [vmem:[#allocation5 + $0x2a0] sm:$0xff]
    %v370 = vld [vmem:[#allocation5 + $0x2a8] sm:$0xf]
    %v371 = vld [vmem:[#allocation5 + $0x2ac] sm:$0xff]
    %v372 = vld [vmem:[#allocation5 + $0x2b4] sm:$0xf]
    %v373 = vld [vmem:[#allocation5 + $0x2b8] sm:$0xff]
    %v374 = vld [vmem:[#allocation5 + $0x2c0] sm:$0xf]
    %v375 = vld [vmem:[#allocation5 + $0x2c4] sm:$0xff]
    %v376 = vld [vmem:[#allocation5 + $0x2cc] sm:$0xf]
    %v377 = vld [vmem:[#allocation5 + $0x2d0] sm:$0xff]
    %v378 = vld [vmem:[#allocation5 + $0x2d8] sm:$0xf]
    %v379 = vld [vmem:[#allocation5 + $0x2dc] sm:$0xff]
    %v380 = vld [vmem:[#allocation5 + $0x2e4] sm:$0xf]
    %v381 = vld [vmem:[#allocation5 + $0x2e8] sm:$0xff]
    %v382 = vld [vmem:[#allocation5 + $0x2f0] sm:$0xf]
    %v383 = vld [vmem:[#allocation5 + $0x2f4] sm:$0xff]
    %v384 = vld [vmem:[#allocation5 + $0x2fc] sm:$0xf]
    %v385 = vld [vmem:[%s5] sm:$0x7]
    %v387 = vlaneseq
    %v388 = vshrl.u32 %v387, 7
    %v389 = vsub.s32 0, %v388
    %v390 = vrot.slane %v385, %v389
    %v391 = vlaneseq
    %v392 = vshrl.u32 %v391, 7
    %v393 = vsub.s32 1, %v392
    %v394 = vrot.slane %v385, %v393
    %v395 = vlaneseq
    %v396 = vshrl.u32 %v395, 7
    %v397 = vsub.s32 2, %v396
    %v398 = vrot.slane %v385, %v397
    %v530 = vunpack.c.l.b16 %v257
    %v531 = vunpack.c.h.b16 %v257
    %v532 = vunpack.c.l.b16 %v258
    %v533 = vunpack.c.l.b16 %v259
    %v534 = vunpack.c.h.b16 %v259
    %v535 = vunpack.c.l.b16 %v260
    %v536 = vunpack.c.l.b16 %v261
    %v537 = vunpack.c.h.b16 %v261
    %v538 = vunpack.c.l.b16 %v262
    %v539 = vunpack.c.l.b16 %v263
    %v540 = vunpack.c.h.b16 %v263
    %v541 = vunpack.c.l.b16 %v264
    %v542 = vunpack.c.l.b16 %v265
    %v543 = vunpack.c.h.b16 %v265
    %v544 = vunpack.c.l.b16 %v266
    %v545 = vunpack.c.l.b16 %v267
    %v546 = vunpack.c.h.b16 %v267
    %v547 = vunpack.c.l.b16 %v268
    %v548 = vunpack.c.l.b16 %v269
    %v549 = vunpack.c.h.b16 %v269
    %v550 = vunpack.c.l.b16 %v270
    %v551 = vunpack.c.l.b16 %v271
    %v552 = vunpack.c.h.b16 %v271
    %v553 = vunpack.c.l.b16 %v272
    %v554 = vunpack.c.l.b16 %v273
    %v555 = vunpack.c.h.b16 %v273
    %v556 = vunpack.c.l.b16 %v274
    %v557 = vunpack.c.l.b16 %v275
    %v558 = vunpack.c.h.b16 %v275
    %v559 = vunpack.c.l.b16 %v276
    %v560 = vunpack.c.l.b16 %v277
    %v561 = vunpack.c.h.b16 %v277
    %v562 = vunpack.c.l.b16 %v278
    %v563 = vunpack.c.l.b16 %v279
    %v564 = vunpack.c.h.b16 %v279
    %v565 = vunpack.c.l.b16 %v280
    %v566 = vunpack.c.l.b16 %v281
    %v567 = vunpack.c.h.b16 %v281
    %v568 = vunpack.c.l.b16 %v282
    %v569 = vunpack.c.l.b16 %v283
    %v570 = vunpack.c.h.b16 %v283
    %v571 = vunpack.c.l.b16 %v284
    %v572 = vunpack.c.l.b16 %v285
    %v573 = vunpack.c.h.b16 %v285
    %v574 = vunpack.c.l.b16 %v286
    %v575 = vunpack.c.l.b16 %v287
    %v576 = vunpack.c.h.b16 %v287
    %v577 = vunpack.c.l.b16 %v288
    %v578 = vunpack.c.l.b16 %v289
    %v579 = vunpack.c.h.b16 %v289
    %v580 = vunpack.c.l.b16 %v290
    %v581 = vunpack.c.l.b16 %v291
    %v582 = vunpack.c.h.b16 %v291
    %v583 = vunpack.c.l.b16 %v292
    %v584 = vunpack.c.l.b16 %v293
    %v585 = vunpack.c.h.b16 %v293
    %v586 = vunpack.c.l.b16 %v294
    %v587 = vunpack.c.l.b16 %v295
    %v588 = vunpack.c.h.b16 %v295
    %v589 = vunpack.c.l.b16 %v296
    %v590 = vunpack.c.l.b16 %v297
    %v591 = vunpack.c.h.b16 %v297
    %v592 = vunpack.c.l.b16 %v298
    %v593 = vunpack.c.l.b16 %v299
    %v594 = vunpack.c.h.b16 %v299
    %v595 = vunpack.c.l.b16 %v300
    %v596 = vunpack.c.l.b16 %v301
    %v597 = vunpack.c.h.b16 %v301
    %v598 = vunpack.c.l.b16 %v302
    %v599 = vunpack.c.l.b16 %v303
    %v600 = vunpack.c.h.b16 %v303
    %v601 = vunpack.c.l.b16 %v304
    %v602 = vunpack.c.l.b16 %v305
    %v603 = vunpack.c.h.b16 %v305
    %v604 = vunpack.c.l.b16 %v306
    %v605 = vunpack.c.l.b16 %v307
    %v606 = vunpack.c.h.b16 %v307
    %v607 = vunpack.c.l.b16 %v308
    %v608 = vunpack.c.l.b16 %v309
    %v609 = vunpack.c.h.b16 %v309
    %v610 = vunpack.c.l.b16 %v310
    %v611 = vunpack.c.l.b16 %v311
    %v612 = vunpack.c.h.b16 %v311
    %v613 = vunpack.c.l.b16 %v312
    %v614 = vunpack.c.l.b16 %v313
    %v615 = vunpack.c.h.b16 %v313
    %v616 = vunpack.c.l.b16 %v314
    %v617 = vunpack.c.l.b16 %v315
    %v618 = vunpack.c.h.b16 %v315
    %v619 = vunpack.c.l.b16 %v316
    %v620 = vunpack.c.l.b16 %v317
    %v621 = vunpack.c.h.b16 %v317
    %v622 = vunpack.c.l.b16 %v318
    %v623 = vunpack.c.l.b16 %v319
    %v624 = vunpack.c.h.b16 %v319
    %v625 = vunpack.c.l.b16 %v320
    %v626 = vunpack.c.l.b16 %v321
    %v627 = vunpack.c.h.b16 %v321
    %v628 = vunpack.c.l.b16 %v322
    %v629 = vunpack.c.l.b16 %v323
    %v630 = vunpack.c.h.b16 %v323
    %v631 = vunpack.c.l.b16 %v324
    %v632 = vunpack.c.l.b16 %v325
    %v633 = vunpack.c.h.b16 %v325
    %v634 = vunpack.c.l.b16 %v326
    %v635 = vunpack.c.l.b16 %v327
    %v636 = vunpack.c.h.b16 %v327
    %v637 = vunpack.c.l.b16 %v328
    %v638 = vunpack.c.l.b16 %v329
    %v639 = vunpack.c.h.b16 %v329
    %v640 = vunpack.c.l.b16 %v330
    %v641 = vunpack.c.l.b16 %v331
    %v642 = vunpack.c.h.b16 %v331
    %v643 = vunpack.c.l.b16 %v332
    %v644 = vunpack.c.l.b16 %v333
    %v645 = vunpack.c.h.b16 %v333
    %v646 = vunpack.c.l.b16 %v334
    %v647 = vunpack.c.l.b16 %v335
    %v648 = vunpack.c.h.b16 %v335
    %v649 = vunpack.c.l.b16 %v336
    %v650 = vunpack.c.l.b16 %v337
    %v651 = vunpack.c.h.b16 %v337
    %v652 = vunpack.c.l.b16 %v338
    %v653 = vunpack.c.l.b16 %v339
    %v654 = vunpack.c.h.b16 %v339
    %v655 = vunpack.c.l.b16 %v340
    %v656 = vunpack.c.l.b16 %v341
    %v657 = vunpack.c.h.b16 %v341
    %v658 = vunpack.c.l.b16 %v342
    %v659 = vunpack.c.l.b16 %v343
    %v660 = vunpack.c.h.b16 %v343
    %v661 = vunpack.c.l.b16 %v344
    %v662 = vunpack.c.l.b16 %v345
    %v663 = vunpack.c.h.b16 %v345
    %v664 = vunpack.c.l.b16 %v346
    %v665 = vunpack.c.l.b16 %v347
    %v666 = vunpack.c.h.b16 %v347
    %v667 = vunpack.c.l.b16 %v348
    %v668 = vunpack.c.l.b16 %v349
    %v669 = vunpack.c.h.b16 %v349
    %v670 = vunpack.c.l.b16 %v350
    %v671 = vunpack.c.l.b16 %v351
    %v672 = vunpack.c.h.b16 %v351
    %v673 = vunpack.c.l.b16 %v352
    %v674 = vunpack.c.l.b16 %v353
    %v675 = vunpack.c.h.b16 %v353
    %v676 = vunpack.c.l.b16 %v354
    %v677 = vunpack.c.l.b16 %v355
    %v678 = vunpack.c.h.b16 %v355
    %v679 = vunpack.c.l.b16 %v356
    %v680 = vunpack.c.l.b16 %v357
    %v681 = vunpack.c.h.b16 %v357
    %v682 = vunpack.c.l.b16 %v358
    %v683 = vunpack.c.l.b16 %v359
    %v684 = vunpack.c.h.b16 %v359
    %v685 = vunpack.c.l.b16 %v360
    %v686 = vunpack.c.l.b16 %v361
    %v687 = vunpack.c.h.b16 %v361
    %v688 = vunpack.c.l.b16 %v362
    %v689 = vunpack.c.l.b16 %v363
    %v690 = vunpack.c.h.b16 %v363
    %v691 = vunpack.c.l.b16 %v364
    %v692 = vunpack.c.l.b16 %v365
    %v693 = vunpack.c.h.b16 %v365
    %v694 = vunpack.c.l.b16 %v366
    %v695 = vunpack.c.l.b16 %v367
    %v696 = vunpack.c.h.b16 %v367
    %v697 = vunpack.c.l.b16 %v368
    %v698 = vunpack.c.l.b16 %v369
    %v699 = vunpack.c.h.b16 %v369
    %v700 = vunpack.c.l.b16 %v370
    %v701 = vunpack.c.l.b16 %v371
    %v702 = vunpack.c.h.b16 %v371
    %v703 = vunpack.c.l.b16 %v372
    %v704 = vunpack.c.l.b16 %v373
    %v705 = vunpack.c.h.b16 %v373
    %v706 = vunpack.c.l.b16 %v374
    %v707 = vunpack.c.l.b16 %v375
    %v708 = vunpack.c.h.b16 %v375
    %v709 = vunpack.c.l.b16 %v376
    %v710 = vunpack.c.l.b16 %v377
    %v711 = vunpack.c.h.b16 %v377
    %v712 = vunpack.c.l.b16 %v378
    %v713 = vunpack.c.l.b16 %v379
    %v714 = vunpack.c.h.b16 %v379
    %v715 = vunpack.c.l.b16 %v380
    %v716 = vunpack.c.l.b16 %v381
    %v717 = vunpack.c.h.b16 %v381
    %v718 = vunpack.c.l.b16 %v382
    %v719 = vunpack.c.l.b16 %v383
    %v720 = vunpack.c.h.b16 %v383
    %v721 = vunpack.c.l.b16 %v384
    %v722 = vpack.c.b16 %v533, %v530
    %v723 = vpack.c.b16 %v534, %v531
    %v724 = vpack.c.b16 %v535, %v532
    %v725 = vpack.c.b16 %v539, %v536
    %v726 = vpack.c.b16 %v540, %v537
    %v727 = vpack.c.b16 %v541, %v538
    %v728 = vpack.c.b16 %v545, %v542
    %v729 = vpack.c.b16 %v546, %v543
    %v730 = vpack.c.b16 %v547, %v544
    %v731 = vpack.c.b16 %v551, %v548
    %v732 = vpack.c.b16 %v552, %v549
    %v733 = vpack.c.b16 %v553, %v550
    %v734 = vpack.c.b16 %v557, %v554
    %v735 = vpack.c.b16 %v558, %v555
    %v736 = vpack.c.b16 %v559, %v556
    %v737 = vpack.c.b16 %v563, %v560
    %v738 = vpack.c.b16 %v564, %v561
    %v739 = vpack.c.b16 %v565, %v562
    %v740 = vpack.c.b16 %v569, %v566
    %v741 = vpack.c.b16 %v570, %v567
    %v742 = vpack.c.b16 %v571, %v568
    %v743 = vpack.c.b16 %v575, %v572
    %v744 = vpack.c.b16 %v576, %v573
    %v745 = vpack.c.b16 %v577, %v574
    %v746 = vpack.c.b16 %v581, %v578
    %v747 = vpack.c.b16 %v582, %v579
    %v748 = vpack.c.b16 %v583, %v580
    %v749 = vpack.c.b16 %v587, %v584
    %v750 = vpack.c.b16 %v588, %v585
    %v751 = vpack.c.b16 %v589, %v586
    %v752 = vpack.c.b16 %v593, %v590
    %v753 = vpack.c.b16 %v594, %v591
    %v754 = vpack.c.b16 %v595, %v592
    %v755 = vpack.c.b16 %v599, %v596
    %v756 = vpack.c.b16 %v600, %v597
    %v757 = vpack.c.b16 %v601, %v598
    %v758 = vpack.c.b16 %v605, %v602
    %v759 = vpack.c.b16 %v606, %v603
    %v760 = vpack.c.b16 %v607, %v604
    %v761 = vpack.c.b16 %v611, %v608
    %v762 = vpack.c.b16 %v612, %v609
    %v763 = vpack.c.b16 %v613, %v610
    %v764 = vpack.c.b16 %v617, %v614
    %v765 = vpack.c.b16 %v618, %v615
    %v766 = vpack.c.b16 %v619, %v616
    %v767 = vpack.c.b16 %v623, %v620
    %v768 = vpack.c.b16 %v624, %v621
    %v769 = vpack.c.b16 %v625, %v622
    %v770 = vpack.c.b16 %v629, %v626
    %v771 = vpack.c.b16 %v630, %v627
    %v772 = vpack.c.b16 %v631, %v628
    %v773 = vpack.c.b16 %v635, %v632
    %v774 = vpack.c.b16 %v636, %v633
    %v775 = vpack.c.b16 %v637, %v634
    %v776 = vpack.c.b16 %v641, %v638
    %v777 = vpack.c.b16 %v642, %v639
    %v778 = vpack.c.b16 %v643, %v640
    %v779 = vpack.c.b16 %v647, %v644
    %v780 = vpack.c.b16 %v648, %v645
    %v781 = vpack.c.b16 %v649, %v646
    %v782 = vpack.c.b16 %v653, %v650
    %v783 = vpack.c.b16 %v654, %v651
    %v784 = vpack.c.b16 %v655, %v652
    %v785 = vpack.c.b16 %v659, %v656
    %v786 = vpack.c.b16 %v660, %v657
    %v787 = vpack.c.b16 %v661, %v658
    %v788 = vpack.c.b16 %v665, %v662
    %v789 = vpack.c.b16 %v666, %v663
    %v790 = vpack.c.b16 %v667, %v664
    %v791 = vpack.c.b16 %v671, %v668
    %v792 = vpack.c.b16 %v672, %v669
    %v793 = vpack.c.b16 %v673, %v670
    %v794 = vpack.c.b16 %v677, %v674
    %v795 = vpack.c.b16 %v678, %v675
    %v796 = vpack.c.b16 %v679, %v676
    %v797 = vpack.c.b16 %v683, %v680
    %v798 = vpack.c.b16 %v684, %v681
    %v799 = vpack.c.b16 %v685, %v682
    %v800 = vpack.c.b16 %v689, %v686
    %v801 = vpack.c.b16 %v690, %v687
    %v802 = vpack.c.b16 %v691, %v688
    %v803 = vpack.c.b16 %v695, %v692
    %v804 = vpack.c.b16 %v696, %v693
    %v805 = vpack.c.b16 %v697, %v694
    %v806 = vpack.c.b16 %v701, %v698
    %v807 = vpack.c.b16 %v702, %v699
    %v808 = vpack.c.b16 %v703, %v700
    %v809 = vpack.c.b16 %v707, %v704
    %v810 = vpack.c.b16 %v708, %v705
    %v811 = vpack.c.b16 %v709, %v706
    %v812 = vpack.c.b16 %v713, %v710
    %v813 = vpack.c.b16 %v714, %v711
    %v814 = vpack.c.b16 %v715, %v712
    %v815 = vpack.c.b16 %v719, %v716
    %v816 = vpack.c.b16 %v720, %v717
    %v817 = vpack.c.b16 %v721, %v718
    %914 = vmatprep.subr.bf16.mxu0 %v744
    %915 = vmatpush1.bf16.msra.mxu0 %v743
    %916 = vmatprep.subr.bf16.mxu0 %v741
    %917 = vmatpush1.bf16.msra.mxu0 %v740
    %918 = vmatprep.subr.bf16.mxu0 %v738
    %919 = vmatpush1.bf16.msra.mxu0 %v737
    %920 = vmatprep.subr.bf16.mxu0 %v735
    %921 = vmatpush1.bf16.msra.mxu0 %v734
    %922 = vmatprep.subr.bf16.mxu0 %v732
    %923 = vmatpush1.bf16.msra.mxu0 %v731
    %924 = vmatprep.subr.bf16.mxu0 %v729
    %925 = vmatpush1.bf16.msra.mxu0 %v728
    %926 = vmatprep.subr.bf16.mxu0 %v726
    %927 = vmatpush1.bf16.msra.mxu0 %v725
    %928 = vmatprep.subr.bf16.mxu0 %v723
    %929 = vmatpush1.bf16.msra.mxu0 %v722
    %930 = vmatprep.subr.bf16.mxu0 %v768
    %931 = vmatpush2.bf16.msra.mxu0 %v767
    %932 = vmatprep.subr.bf16.mxu0 %v765
    %933 = vmatpush2.bf16.msra.mxu0 %v764
    %934 = vmatprep.subr.bf16.mxu0 %v762
    %935 = vmatpush2.bf16.msra.mxu0 %v761
    %936 = vmatprep.subr.bf16.mxu0 %v759
    %937 = vmatpush2.bf16.msra.mxu0 %v758
    %938 = vmatprep.subr.bf16.mxu0 %v756
    %939 = vmatpush2.bf16.msra.mxu0 %v755
    %940 = vmatprep.subr.bf16.mxu0 %v753
    %941 = vmatpush2.bf16.msra.mxu0 %v752
    %942 = vmatprep.subr.bf16.mxu0 %v750
    %943 = vmatpush2.bf16.msra.mxu0 %v749
    %944 = vmatprep.subr.bf16.mxu0 %v747
    %945 = vmatpush2.bf16.msra.mxu0 %v746
    %946 = vmatprep.mubr.bf16.mxu0 %v254
    %947 = vmatmul.mubr.bf16.gmra.mxu0 %v253
    %v948 = vpop.f32.mrf.mxu0
    %v949 = vadd.f32 %v390, %v948
    %v950 = vpop.f32.mrf.mxu0
    %v951 = vadd.f32 %v394, %v950
    %v952 = vpop.f32.mrf.mxu0
    %v953 = vpop.f32.mrf.mxu0
    %954 = vdwg.mxu0
    %955 = vmatprep.subr.bf16.mxu0 %v792
    %956 = vmatpush1.bf16.msra.mxu0 %v791
    %957 = vmatprep.subr.bf16.mxu0 %v789
    %958 = vmatpush1.bf16.msra.mxu0 %v788
    %959 = vmatprep.subr.bf16.mxu0 %v786
    %960 = vmatpush1.bf16.msra.mxu0 %v785
    %961 = vmatprep.subr.bf16.mxu0 %v783
    %962 = vmatpush1.bf16.msra.mxu0 %v782
    %963 = vmatprep.subr.bf16.mxu0 %v780
    %964 = vmatpush1.bf16.msra.mxu0 %v779
    %965 = vmatprep.subr.bf16.mxu0 %v777
    %966 = vmatpush1.bf16.msra.mxu0 %v776
    %967 = vmatprep.subr.bf16.mxu0 %v774
    %968 = vmatpush1.bf16.msra.mxu0 %v773
    %969 = vmatprep.subr.bf16.mxu0 %v771
    %970 = vmatpush1.bf16.msra.mxu0 %v770
    %971 = vmatprep.subr.bf16.mxu0 %v816
    %972 = vmatpush2.bf16.msra.mxu0 %v815
    %973 = vmatprep.subr.bf16.mxu0 %v813
    %974 = vmatpush2.bf16.msra.mxu0 %v812
    %975 = vmatprep.subr.bf16.mxu0 %v810
    %976 = vmatpush2.bf16.msra.mxu0 %v809
    %977 = vmatprep.subr.bf16.mxu0 %v807
    %978 = vmatpush2.bf16.msra.mxu0 %v806
    %979 = vmatprep.subr.bf16.mxu0 %v804
    %980 = vmatpush2.bf16.msra.mxu0 %v803
    %981 = vmatprep.subr.bf16.mxu0 %v801
    %982 = vmatpush2.bf16.msra.mxu0 %v800
    %983 = vmatprep.subr.bf16.mxu0 %v798
    %984 = vmatpush2.bf16.msra.mxu0 %v797
    %985 = vmatprep.subr.bf16.mxu0 %v795
    %986 = vmatpush2.bf16.msra.mxu0 %v794
    %987 = vmatprep.mubr.bf16.mxu0 %v256
    %988 = vmatmul.mubr.bf16.gmra.mxu0 %v255
    %v989 = vpop.f32.mrf.mxu0
    %v990 = vadd.f32 %v949, %v989
    %v991 = vpop.f32.mrf.mxu0
    %v992 = vadd.f32 %v951, %v991
    %v993 = vpop.f32.mrf.mxu0
    %v994 = vpop.f32.mrf.mxu0
    %995 = vdwg.mxu0
    %996 = vmatprep.subr.bf16.mxu0 0
    %997 = vmatpush1.bf16.msra.mxu0 %v745
    %998 = vmatprep.subr.bf16.mxu0 0
    %999 = vmatpush1.bf16.msra.mxu0 %v742
    %1000 = vmatprep.subr.bf16.mxu0 0
    %1001 = vmatpush1.bf16.msra.mxu0 %v739
    %1002 = vmatprep.subr.bf16.mxu0 0
    %1003 = vmatpush1.bf16.msra.mxu0 %v736
    %1004 = vmatprep.subr.bf16.mxu0 0
    %1005 = vmatpush1.bf16.msra.mxu0 %v733
    %1006 = vmatprep.subr.bf16.mxu0 0
    %1007 = vmatpush1.bf16.msra.mxu0 %v730
    %1008 = vmatprep.subr.bf16.mxu0 0
    %1009 = vmatpush1.bf16.msra.mxu0 %v727
    %1010 = vmatprep.subr.bf16.mxu0 0
    %1011 = vmatpush1.bf16.msra.mxu0 %v724
    %1012 = vmatprep.subr.bf16.mxu0 0
    %1013 = vmatpush2.bf16.msra.mxu0 %v769
    %1014 = vmatprep.subr.bf16.mxu0 0
    %1015 = vmatpush2.bf16.msra.mxu0 %v766
    %1016 = vmatprep.subr.bf16.mxu0 0
    %1017 = vmatpush2.bf16.msra.mxu0 %v763
    %1018 = vmatprep.subr.bf16.mxu0 0
    %1019 = vmatpush2.bf16.msra.mxu0 %v760
    %1020 = vmatprep.subr.bf16.mxu0 0
    %1021 = vmatpush2.bf16.msra.mxu0 %v757
    %1022 = vmatprep.subr.bf16.mxu0 0
    %1023 = vmatpush2.bf16.msra.mxu0 %v754
    %1024 = vmatprep.subr.bf16.mxu0 0
    %1025 = vmatpush2.bf16.msra.mxu0 %v751
    %1026 = vmatprep.subr.bf16.mxu0 0
    %1027 = vmatpush2.bf16.msra.mxu0 %v748
    %1028 = vmatprep.mubr.bf16.mxu0 %v254
    %1029 = vmatmul.mubr.bf16.gmra.mxu0 %v253
    %v1030 = vpop.f32.mrf.mxu0
    %v1031 = vadd.f32 %v398, %v1030
    %v1032 = vpop.f32.mrf.mxu0
    %v1033 = vpop.f32.mrf.mxu0
    %v1034 = vpop.f32.mrf.mxu0
    %1035 = vdwg.mxu0
    %1036 = vmatprep.subr.bf16.mxu0 0
    %1037 = vmatpush1.bf16.msra.mxu0 %v793
    %1038 = vmatprep.subr.bf16.mxu0 0
    %1039 = vmatpush1.bf16.msra.mxu0 %v790
    %1040 = vmatprep.subr.bf16.mxu0 0
    %1041 = vmatpush1.bf16.msra.mxu0 %v787
    %1042 = vmatprep.subr.bf16.mxu0 0
    %1043 = vmatpush1.bf16.msra.mxu0 %v784
    %1044 = vmatprep.subr.bf16.mxu0 0
    %1045 = vmatpush1.bf16.msra.mxu0 %v781
    %1046 = vmatprep.subr.bf16.mxu0 0
    %1047 = vmatpush1.bf16.msra.mxu0 %v778
    %1048 = vmatprep.subr.bf16.mxu0 0
    %1049 = vmatpush1.bf16.msra.mxu0 %v775
    %1050 = vmatprep.subr.bf16.mxu0 0
    %1051 = vmatpush1.bf16.msra.mxu0 %v772
    %1052 = vmatprep.subr.bf16.mxu0 0
    %1053 = vmatpush2.bf16.msra.mxu0 %v817
    %1054 = vmatprep.subr.bf16.mxu0 0
    %1055 = vmatpush2.bf16.msra.mxu0 %v814
    %1056 = vmatprep.subr.bf16.mxu0 0
    %1057 = vmatpush2.bf16.msra.mxu0 %v811
    %1058 = vmatprep.subr.bf16.mxu0 0
    %1059 = vmatpush2.bf16.msra.mxu0 %v808
    %1060 = vmatprep.subr.bf16.mxu0 0
    %1061 = vmatpush2.bf16.msra.mxu0 %v805
    %1062 = vmatprep.subr.bf16.mxu0 0
    %1063 = vmatpush2.bf16.msra.mxu0 %v802
    %1064 = vmatprep.subr.bf16.mxu0 0
    %1065 = vmatpush2.bf16.msra.mxu0 %v799
    %1066 = vmatprep.subr.bf16.mxu0 0
    %1067 = vmatpush2.bf16.msra.mxu0 %v796
    %1068 = vmatprep.mubr.bf16.mxu0 %v256
    %1069 = vmatmul.mubr.bf16.gmra.mxu0 %v255
    %v1070 = vpop.f32.mrf.mxu0
    %v1071 = vadd.f32 %v1031, %v1070
    %v1072 = vpop.f32.mrf.mxu0
    %v1073 = vpop.f32.mrf.mxu0
    %v1074 = vpop.f32.mrf.mxu0
    %1075 = vdwg.mxu0
    %v1076 = vmax.f32 %v990, 0.0
    %v1077 = vmax.f32 %v992, 0.0
    %v1078 = vmax.f32 %v1071, 0.0
    %v1079 = vld [vmem:[%s6] sm:$0x7]
    %v1081 = vlaneseq
    %v1082 = vshrl.u32 %v1081, 7
    %v1083 = vsub.s32 0, %v1082
    %v1084 = vrot.slane %v1079, %v1083
    %v1085 = vlaneseq
    %v1086 = vshrl.u32 %v1085, 7
    %v1087 = vsub.s32 1, %v1086
    %v1088 = vrot.slane %v1079, %v1087
    %v1089 = vlaneseq
    %v1090 = vshrl.u32 %v1089, 7
    %v1091 = vsub.s32 2, %v1090
    %v1092 = vrot.slane %v1079, %v1091
    %v1096 = vmul.f32 %v1076, %v1084
    %v1097 = vmul.f32 %v1077, %v1088
    %v1098 = vmul.f32 %v1078, %v1092
    %v1099 = vadd.f32 %v1096, %v1097
    %v1100 = vadd.f32 %v1099, %v1098
    %1101 = vadd.xlane.f32.xlu0 %v1100
    %v1102 = vpop.xlane.xlu0 %1101
    %s1103 = sld [smem:[#allocation2]]
    %v1104 = vstv %s1103
    %v1105 = vadd.f32 %v1102, %v1104
    %vm1106 = vcmask 7168
    %1107 = vst.msk [vmem:[%s8] sm:$0xff] %vm1106, %v1105
    // Predicated region
    $region42: #{tpu_custom_call.1} parent=1 // pred_check
      _
    $region43: #{tpu_custom_call.1} parent=1 // pred_check_branch
      %1109 = sbr.rel (0) target = $region45
    $region44: #{tpu_custom_call.1} parent=1 // pred_region
      _
    $region45: #{tpu_custom_call.1} parent=1 // pred_fallthru
      _
    // Predicated region
    $region46: #{tpu_custom_call.1} parent=1 // pred_check
      _
    $region47: #{tpu_custom_call.1} parent=1 // pred_check_branch
      %1111 = sbr.rel (0) target = $region49
    $region48: #{tpu_custom_call.1} parent=1 // pred_region
      _
    $region49: #{tpu_custom_call.1} parent=1 // pred_fallthru
      _
    %1112 = vsyncpa [#allocation4], 1
    %1113 = vsyncpa [#allocation6], 1

</llo_original>
